<compile_context>
chip_gen: v5e
topology: v5e:2x2
jax: 0.10.0
libtpu: 0.0.40
codegen_flags: <defaults>
</compile_context>

<pallas_src>
import functools
import math

import jax
import jax.numpy as jnp
from jax import lax
from jax.experimental import pallas as pl
from jax.experimental.pallas import tpu as pltpu


_NEG_INF = -1e30


def _round_up(x, m):
    return ((x + m - 1) // m) * m


def _vmem_limit(*byte_counts):
    est = sum(int(b) for b in byte_counts)
    return int(min(max(2 * est + (2 << 20), 16 << 20), 64 << 20))


# ---------------------------------------------------------------------------
# Kernel 1: batch-mean of context + K/V projections (runs once per sequence)
# ---------------------------------------------------------------------------
def _kv_proj_kernel(ctx_ref, wk_ref, wv_ref, k_ref, v_ref, *, inv_b):
    # mean over the leading (batch) axis in f32, then bf16 for the MXU.
    ctx = (jnp.sum(ctx_ref[...], axis=0) * inv_b).astype(jnp.bfloat16)      # (tk, Ckv)
    k_ref[...] = jnp.dot(ctx, wk_ref[...],
                         preferred_element_type=jnp.float32).astype(k_ref.dtype)
    v_ref[...] = jnp.dot(ctx, wv_ref[...],
                         preferred_element_type=jnp.float32).astype(v_ref.dtype)


def _project_kv(ctx3, wk, wv, *, tk):
    b, t_pad, c_kv = ctx3.shape
    inner = wk.shape[1]
    vmem = _vmem_limit(
        2 * b * tk * c_kv * ctx3.dtype.itemsize,   # ctx tile, double-buffered
        2 * c_kv * inner * 2,                      # wk + wv, single-buffered bf16
        2 * 2 * tk * inner * 2,                    # k/v output tiles
    )
    kernel = functools.partial(_kv_proj_kernel, inv_b=1.0 / b)
    return pl.pallas_call(
        kernel,
        out_shape=(jax.ShapeDtypeStruct((t_pad, inner), jnp.bfloat16),
                   jax.ShapeDtypeStruct((t_pad, inner), jnp.bfloat16)),
        grid=(t_pad // tk,),
        in_specs=[
            pl.BlockSpec((b, tk, c_kv), lambda i: (0, i, 0)),
            pl.BlockSpec((c_kv, inner), lambda i: (0, 0), pipeline_mode=pl.Buffered(1)),
            pl.BlockSpec((c_kv, inner), lambda i: (0, 0), pipeline_mode=pl.Buffered(1)),
        ],
        out_specs=(pl.BlockSpec((tk, inner), lambda i: (i, 0)),
                   pl.BlockSpec((tk, inner), lambda i: (i, 0))),
        compiler_params=pltpu.CompilerParams(
            dimension_semantics=("parallel",), vmem_limit_bytes=vmem),
    )(ctx3, wk, wv)


# ---------------------------------------------------------------------------
# Kernel 2: Q projection + online-softmax MHA (tiled KV) + output projection
# ---------------------------------------------------------------------------
def _attention_kernel(x_ref, wq_ref, k_ref, v_ref, wo_ref, bo_ref, o_ref,
                      q_sc, m_sc, l_sc, acc_sc,
                      *, heads, dim_head, tk, t_real, need_kv_mask):
    kv_i = pl.program_id(1)

    @pl.when(kv_i == 0)
    def _init():
        # Q projection once per query tile (softmax scale is folded into wq at init).
        q = jnp.dot(x_ref[...], wq_ref[...], preferred_element_type=jnp.float32)
        q_sc[...] = q.astype(q_sc.dtype)
        m_sc[...] = jnp.full_like(m_sc, _NEG_INF)
        l_sc[...] = jnp.zeros_like(l_sc)
        acc_sc[...] = jnp.zeros_like(acc_sc)

    k = k_ref[...]                                 # (tk, inner) bf16
    v = v_ref[...]                                 # (tk, inner) bf16

    if need_kv_mask:
        col = kv_i * tk + lax.broadcasted_iota(jnp.int32, (1, tk), 1)
        kv_valid = col < t_real                    # (1, tk)

    # Static unroll over heads; head columns are static lane slices of the q/k/v slabs.
    # TODO(synk): with dim_head < 128 the per-head QK^T under-fills the MXU width; a
    # head grid axis / batched layout would improve utilization further.
    for h in range(heads):
        lo = h * dim_head
        hi = lo + dim_head
        # Scores without materializing k^T (contract last dims of both operands).
        s = lax.dot_general(q_sc[:, lo:hi], k[:, lo:hi],
                            (((1,), (1,)), ((), ())),
                            preferred_element_type=jnp.float32)        # (tq, tk) f32
        if need_kv_mask:
            s = jnp.where(kv_valid, s, _NEG_INF)
        m_prev = m_sc[:, h:h + 1]
        m_new = jnp.maximum(m_prev, jnp.max(s, axis=-1, keepdims=True))
        alpha = jnp.exp(m_prev - m_new)
        p = jnp.exp(s - m_new)                                          # f32
        l_sc[:, h:h + 1] = alpha * l_sc[:, h:h + 1] + jnp.sum(p, axis=-1, keepdims=True)
        pv = jnp.dot(p.astype(v.dtype), v[:, lo:hi],
                     preferred_element_type=jnp.float32)                # (tq, D) f32
        acc_sc[:, lo:hi] = alpha * acc_sc[:, lo:hi] + pv
        m_sc[:, h:h + 1] = m_new

    @pl.when(kv_i == pl.num_programs(1) - 1)
    def _finalize():
        inv_l = pl.reciprocal(l_sc[...], approx=True)                   # (tq, H) EUP
        for h in range(heads):
            lo = h * dim_head
            hi = lo + dim_head
            acc_sc[:, lo:hi] = acc_sc[:, lo:hi] * inv_l[:, h:h + 1]
        attn = acc_sc[...].astype(jnp.bfloat16)        # (tq, inner) lane-dense slab
        out = jnp.dot(attn, wo_ref[...], preferred_element_type=jnp.float32) + bo_ref[...]
        o_ref[...] = out.astype(o_ref.dtype)


def fused_extended_attention(x, ctx3, wq, wk, wv, wo, bo, *, heads, dim_head):
    s, c_q = x.shape
    _, t, _ = ctx3.shape
    inner = heads * dim_head
    out_dtype = x.dtype

    # Generation-aware tiles (256 is full MXU M on v6e/v7x and fits v7x's 64 MiB VMEM);
    # pad sequence lengths to tile multiples instead of degenerating to one giant block.
    tq = min(256, _round_up(s, 8))
    s_pad = _round_up(s, tq)
    tk = min(256, _round_up(t, 8))
    t_pad = _round_up(t, tk)
    need_kv_mask = t_pad != t

    if s_pad != s:
        x = jnp.pad(x, ((0, s_pad - s), (0, 0)))
    if need_kv_mask:
        ctx3 = jnp.pad(ctx3, ((0, 0), (0, t_pad - t), (0, 0)))

    x_bf = x.astype(jnp.bfloat16)
    bo2 = bo.reshape(1, c_q)

    # Hoisted: context mean + K/V projection computed exactly once.
    k_mat, v_mat = _project_kv(ctx3, wk, wv, tk=tk)

    vmem = _vmem_limit(
        2 * tq * c_q * 2,        # x tile (bf16, double-buffered)
        c_q * inner * 2,         # wq (bf16, single-buffered)
        2 * 2 * tk * inner * 2,  # k & v tiles (bf16, double-buffered)
        inner * c_q * 2,         # wo
        c_q * 4,                 # bo
        2 * tq * c_q * 4,        # output tile (f32, double-buffered)
        tq * inner * 2,          # q scratch (bf16)
        2 * tq * heads * 4,      # m/l scratch
        tq * inner * 4,          # acc scratch
        4 * tq * tk * 4,         # live f32 score temporaries
    )

    cost = pl.CostEstimate(
        flops=2 * s_pad * c_q * inner + 4 * s_pad * t_pad * inner + 2 * s_pad * inner * c_q,
        transcendentals=s_pad * t_pad * heads,
        bytes_accessed=int(x_bf.size * 2 + 2 * k_mat.size * 2 + s_pad * c_q * 4
                           + 2 * c_q * inner * 2),
    )

    kernel = functools.partial(
        _attention_kernel, heads=heads, dim_head=dim_head, tk=tk,
        t_real=t, need_kv_mask=need_kv_mask)

    out = pl.pallas_call(
        kernel,
        out_shape=jax.ShapeDtypeStruct((s_pad, c_q), out_dtype),
        grid=(s_pad // tq, t_pad // tk),
        in_specs=[
            pl.BlockSpec((tq, c_q), lambda i, j: (i, 0)),                         # x tile
            pl.BlockSpec((c_q, inner), lambda i, j: (0, 0),
                         pipeline_mode=pl.Buffered(1)),                           # wq
            pl.BlockSpec((tk, inner), lambda i, j: (j, 0)),                       # k tile
            pl.BlockSpec((tk, inner), lambda i, j: (j, 0)),                       # v tile
            pl.BlockSpec((inner, c_q), lambda i, j: (0, 0),
                         pipeline_mode=pl.Buffered(1)),                           # wo
            pl.BlockSpec((1, c_q), lambda i, j: (0, 0),
                         pipeline_mode=pl.Buffered(1)),                           # bo
        ],
        out_specs=pl.BlockSpec((tq, c_q), lambda i, j: (i, 0)),
        scratch_shapes=[
            pltpu.VMEM((tq, inner), jnp.bfloat16),   # q slab
            pltpu.VMEM((tq, heads), jnp.float32),    # online-softmax max
            pltpu.VMEM((tq, heads), jnp.float32),    # online-softmax sum
            pltpu.VMEM((tq, inner), jnp.float32),    # per-head output accumulator slab
        ],
        compiler_params=pltpu.CompilerParams(
            dimension_semantics=("parallel", "arbitrary"),
            vmem_limit_bytes=vmem),
        cost_estimate=cost,
    )(x_bf, wq, k_mat, v_mat, wo, bo2)

    return out[:s]


# ---------------------------------------------------------------------------
# ExtendedAttention forward (thin JAX glue; all math lives in the kernels)
# ---------------------------------------------------------------------------
def init_params(key, query_dim, heads, dim_head, cross_attention_dim=None):
    cross_dim = cross_attention_dim if cross_attention_dim is not None else query_dim
    inner = heads * dim_head
    k1, k2, k3, k4, k5 = jax.random.split(key, 5)
    sc_q = 1.0 / math.sqrt(query_dim)
    sc_c = 1.0 / math.sqrt(cross_dim)
    sc_i = 1.0 / math.sqrt(inner)
    softmax_scale = 1.0 / math.sqrt(dim_head)
    wq = jax.random.normal(k1, (query_dim, inner), jnp.float32) * sc_q
    return {
        "heads": heads,
        "dim_head": dim_head,
        # diffusers CrossAttention: to_q/to_k/to_v are bias=False, to_out has bias.
        # Softmax scale folded into wq once (one-time parameter transform);
        # MXU operands stored bf16, bias stays f32.
        "wq": (wq * softmax_scale).astype(jnp.bfloat16),
        "wk": (jax.random.normal(k2, (cross_dim, inner), jnp.float32) * sc_c).astype(jnp.bfloat16),
        "wv": (jax.random.normal(k3, (cross_dim, inner), jnp.float32) * sc_c).astype(jnp.bfloat16),
        "wo": (jax.random.normal(k4, (inner, query_dim), jnp.float32) * sc_i).astype(jnp.bfloat16),
        "bo": jax.random.normal(k5, (query_dim,), jnp.float32) * 0.01,
    }


def extended_attention_forward(params, hidden_states, encoder_hidden_states=None,
                               attention_mask=None):
    if attention_mask is not None:
        # TODO(synk): attention_mask is not supported by this fused kernel.
        raise NotImplementedError("attention_mask is not supported by the Pallas kernel")
    b, hw, c = hidden_states.shape
    # rearrange '(p b) hw c -> p (b hw) c' with p=1: fold batch into the sequence.
    x = hidden_states.reshape(b * hw, c)
    if encoder_hidden_states is not None:
        # reduce '(p b) t c -> p t c' (mean over b, p=1): done inside the KV kernel.
        ctx3 = encoder_hidden_states
    else:
        ctx3 = x[None]  # leading axis of 1 -> in-kernel mean is a no-op
    out = fused_extended_attention(
        x, ctx3, params["wq"], params["wk"], params["wv"], params["wo"], params["bo"],
        heads=params["heads"], dim_head=params["dim_head"])
    # rearrange 'p (b hw) c -> (p b) hw c' with p=1.
    return out.reshape(b, hw, c)


class ExtendedAttentionPallas:
    """Mirrors ExtendedAttention: wraps the base attention and keeps `history`."""

    def __init__(self, params, index=0):
        self.params = params
        self.index = index
        self.history = None

    def __call__(self, hidden_states, encoder_hidden_states=None, attention_mask=None):
        out = extended_attention_forward(
            self.params, hidden_states, encoder_hidden_states, attention_mask)
        self.history = jax.lax.stop_gradient(out)  # analogue of out.detach()
        return out


# ---------------------------------------------------------------------------
# Main
# ---------------------------------------------------------------------------
if __name__ == "__main__":
    key = jax.random.PRNGKey(0)
    k_param, k_hidden, k_enc = jax.random.split(key, 3)

    batch, hw, channels = 2, 16, 32
    heads, dim_head = 4, 8
    t_enc = 8

    params = init_params(k_param, query_dim=channels, heads=heads, dim_head=dim_head,
                         cross_attention_dim=channels)
    module = ExtendedAttentionPallas(params, index=0)

    hidden_states = jax.random.normal(k_hidden, (batch, hw, channels), jnp.float32)
    encoder_hidden_states = jax.random.normal(k_enc, (batch, t_enc, channels), jnp.float32)

    # self-attention path (encoder_hidden_states=None)
    out_self = module(hidden_states)
    # cross-attention path (encoder states batch-mean-reduced inside the KV kernel, p=1)
    out_cross = module(hidden_states, encoder_hidden_states)

    jax.block_until_ready(out_self)
    jax.block_until_ready(out_cross)
    assert out_self.shape == (batch, hw, channels)
    assert out_cross.shape == (batch, hw, channels)
    assert bool(jnp.all(jnp.isfinite(out_self)))
    assert bool(jnp.all(jnp.isfinite(out_cross)))
    print("KERNEL_OK")
</pallas_src>

<mosaic_0001>
module attributes {stable_mosaic.version = 11 : i64} {
  func.func @_kv_proj_kernel(%arg0: i32, %arg1: memref<1x32x32xf32, #tpu.memory_space<vmem>>, %arg2: memref<32x32xbf16, #tpu.memory_space<vmem>>, %arg3: memref<32x32xbf16, #tpu.memory_space<vmem>>, %arg4: memref<32x32xbf16, #tpu.memory_space<vmem>>, %arg5: memref<32x32xbf16, #tpu.memory_space<vmem>>) attributes {dimension_semantics = [#tpu.dimension_semantics<parallel>], iteration_bounds = array<i64: 1>, scalar_prefetch = 0 : i64, scratch_operands = 0 : i64, tpu.core_type = #tpu.core_type<tc>, window_params = [{transform_indices = @transform_0, window_bounds = array<i64: 1, 32, 32>}, {pipeline_mode = #tpu.pipeline_mode<synchronous>, transform_indices = @transform_1, window_bounds = array<i64: 32, 32>}, {pipeline_mode = #tpu.pipeline_mode<synchronous>, transform_indices = @transform_2, window_bounds = array<i64: 32, 32>}, {transform_indices = @transform_3, window_bounds = array<i64: 32, 32>}, {transform_indices = @transform_4, window_bounds = array<i64: 32, 32>}]} {
    %c0 = arith.constant 0 : index
    %c0_0 = arith.constant 0 : index
    %c0_1 = arith.constant 0 : index
    %0 = vector.load %arg1[%c0, %c0_0, %c0_1] : memref<1x32x32xf32, #tpu.memory_space<vmem>>, vector<1x32x32xf32>
    %cst = arith.constant dense<0.000000e+00> : vector<32x32xf32>
    %1 = vector.multi_reduction <add>, %0, %cst [0] : vector<1x32x32xf32> to vector<32x32xf32>
    %cst_2 = arith.constant 1.000000e+00 : f32
    %2 = vector.broadcast %cst_2 : f32 to vector<32x32xf32>
    %3 = arith.mulf %1, %2 : vector<32x32xf32>
    %4 = arith.truncf %3 : vector<32x32xf32> to vector<32x32xbf16>
    %c0_3 = arith.constant 0 : index
    %c0_4 = arith.constant 0 : index
    %5 = vector.load %arg2[%c0_3, %c0_4] : memref<32x32xbf16, #tpu.memory_space<vmem>>, vector<32x32xbf16>
    %cst_5 = arith.constant dense<0.000000e+00> : vector<32x32xf32>
    %6 = tpu.matmul %4, %5, %cst_5 {dimension_numbers = #tpu.dot_dimension_numbers<[1], [0], [0], [1], [0, 0, 1, 1], [], []>} : vector<32x32xbf16>, vector<32x32xbf16>, vector<32x32xf32> -> vector<32x32xf32>
    %7 = arith.truncf %6 : vector<32x32xf32> to vector<32x32xbf16>
    %c0_6 = arith.constant 0 : index
    %c0_7 = arith.constant 0 : index
    %8 = vector.load %arg4[%c0_6, %c0_7] : memref<32x32xbf16, #tpu.memory_space<vmem>>, vector<32x32xbf16>
    tpu.vector_store %arg4[%c0_6, %c0_7], %7 {strides = array<i32>} : memref<32x32xbf16, #tpu.memory_space<vmem>>, vector<32x32xbf16>,
    %c0_8 = arith.constant 0 : index
    %c0_9 = arith.constant 0 : index
    %9 = vector.load %arg3[%c0_8, %c0_9] : memref<32x32xbf16, #tpu.memory_space<vmem>>, vector<32x32xbf16>
    %cst_10 = arith.constant dense<0.000000e+00> : vector<32x32xf32>
    %10 = tpu.matmul %4, %9, %cst_10 {dimension_numbers = #tpu.dot_dimension_numbers<[1], [0], [0], [1], [0, 0, 1, 1], [], []>} : vector<32x32xbf16>, vector<32x32xbf16>, vector<32x32xf32> -> vector<32x32xf32>
    %11 = arith.truncf %10 : vector<32x32xf32> to vector<32x32xbf16>
    %c0_11 = arith.constant 0 : index
    %c0_12 = arith.constant 0 : index
    %12 = vector.load %arg5[%c0_11, %c0_12] : memref<32x32xbf16, #tpu.memory_space<vmem>>, vector<32x32xbf16>
    tpu.vector_store %arg5[%c0_11, %c0_12], %11 {strides = array<i32>} : memref<32x32xbf16, #tpu.memory_space<vmem>>, vector<32x32xbf16>,
    return
  }
  func.func @transform_0(%arg0: i32) -> (i32, i32, i32) {
    %c0_i32 = arith.constant 0 : i32
    %c0_i32_0 = arith.constant 0 : i32
    %c0_i32_1 = arith.constant 0 : i32
    return %c0_i32, %arg0, %c0_i32_0 : i32, i32, i32
  }
  func.func @transform_1(%arg0: i32) -> (i32, i32) {
    %c0_i32 = arith.constant 0 : i32
    %c0_i32_0 = arith.constant 0 : i32
    %c0_i32_1 = arith.constant 0 : i32
    return %c0_i32, %c0_i32_0 : i32, i32
  }
  func.func @transform_2(%arg0: i32) -> (i32, i32) {
    %c0_i32 = arith.constant 0 : i32
    %c0_i32_0 = arith.constant 0 : i32
    %c0_i32_1 = arith.constant 0 : i32
    return %c0_i32, %c0_i32_0 : i32, i32
  }
  func.func @transform_3(%arg0: i32) -> (i32, i32) {
    %c0_i32 = arith.constant 0 : i32
    %c0_i32_0 = arith.constant 0 : i32
    return %arg0, %c0_i32 : i32, i32
  }
  func.func @transform_4(%arg0: i32) -> (i32, i32) {
    %c0_i32 = arith.constant 0 : i32
    %c0_i32_0 = arith.constant 0 : i32
    return %arg0, %c0_i32 : i32, i32
  }
}

</mosaic_0001>

<llo_original>
// kernel: tpu_custom_call.1
$region0: #{tpu_custom_call.1}
  #allocation0 [shape = 'u32[]', space=smem, size = 0x4, offset = 0x4, fixed_abs, tag = 'smem constant byte address 0x4 - core index']
  #allocation1 [shape = 'u32[72,128]{1,0:T(1,128)}', space=vmem, size = 0x9000, scoped, tag = 'internal scratch']
  %s0 = inlined_call_operand.hbm [shape: f32[1,32,32], index: 0, kind: input, shape index: {}]
  %s1 = inlined_call_operand.hbm [shape: bf16[32,32], index: 1, kind: input, shape index: {}]
  %s2 = inlined_call_operand.hbm [shape: bf16[32,32], index: 2, kind: input, shape index: {}]
  %s3 = inlined_call_operand.hbm [shape: bf16[32,32], index: 3, kind: output, shape index: {0}]
  %s4 = inlined_call_operand.hbm [shape: bf16[32,32], index: 4, kind: output, shape index: {1}]
  %5 = xla_tuple %s3, %s4
  %s6 = sld [smem:[#allocation0]]
  $region42: #{tpu_custom_call.1} parent=0
    _
  %s8 = ssub.s32 1, %s6
  %s9 = scalar_select 0, %s8, %s6
  $region1: #{tpu_custom_call.1} parent=0
    #allocation2 [shape = 'u8[16384]{0}', space=vmem, size = 0x4000, scoped, tag = 'input window, operand 0, single buffered']
    #allocation3 [shape = 's32[1]{0}', space=sflag, size = 0x4, scoped, tag = 'scoped memory for tpu_custom_call.1']
    #allocation4 [shape = 's32[1]{0}', space=sflag, size = 0x4, scoped, tag = 'scoped memory for tpu_custom_call.1']
    #allocation5 [shape = 'u8[8192]{0}', space=vmem, size = 0x2000, scoped, tag = 'input window, operand 1, single buffered']
    #allocation6 [shape = 's32[1]{0}', space=sflag, size = 0x4, scoped, tag = 'scoped memory for tpu_custom_call.1']
    #allocation7 [shape = 'u8[8192]{0}', space=vmem, size = 0x2000, scoped, tag = 'input window, operand 2, single buffered']
    #allocation8 [shape = 'u8[8192]{0}', space=vmem, size = 0x2000, scoped, tag = 'output window, operand 0, single buffered']
    #allocation9 [shape = 'u8[8192]{0}', space=vmem, size = 0x2000, scoped, tag = 'output window, operand 1, single buffered']
    #allocation10 [shape = 's32[1]{0}', space=sflag, size = 0x4, scoped, tag = 'scoped memory for tpu_custom_call.1']
    %10 = vsyncpa [#allocation3], 0
    %11 = vsyncpa [#allocation6], 0
    %12 = vsyncpa [#allocation4], 0
    %13 = vsyncpa [#allocation10], 0
    // Predicated region
    $region2: #{tpu_custom_call.1} parent=1 // pred_check
      _
    $region3: #{tpu_custom_call.1} parent=1 // pred_check_branch
      %15 = sbr.rel (0) target = $region5
    $region4: #{tpu_custom_call.1} parent=1 // pred_region
      %17 = vsyncadd [#allocation3], 0
      %s18 = sshll.u32 %s0, 4
      %s19 = int_to_ptr.hbm [resolvable:$true] %s18
      %s20 = sshll.u32 [#allocation2], 4
      %s21 = int_to_ptr.vmem [resolvable:$true] %s20
      %26 = dma.hbm_to_vmem [thread:$0]  %s19, 512, %s21, [#allocation3], 128, 128, 8
    $region5: #{tpu_custom_call.1} parent=1 // pred_fallthru
      _
    // Predicated region
    $region6: #{tpu_custom_call.1} parent=1 // pred_check
      _
    $region7: #{tpu_custom_call.1} parent=1 // pred_check_branch
      %28 = sbr.rel (0) target = $region9
    $region8: #{tpu_custom_call.1} parent=1 // pred_region
      %30 = vsyncadd [#allocation6], 0
      %s31 = sshll.u32 %s1, 4
      %s32 = int_to_ptr.hbm [resolvable:$true] %s31
      %s33 = sshll.u32 [#allocation5], 4
      %s34 = int_to_ptr.vmem [resolvable:$true] %s33
      %39 = dma.hbm_to_vmem [thread:$0]  %s32, 256, %s34, [#allocation6], 64, 64, 4
    $region9: #{tpu_custom_call.1} parent=1 // pred_fallthru
      _
    // Predicated region
    $region10: #{tpu_custom_call.1} parent=1 // pred_check
      _
    $region11: #{tpu_custom_call.1} parent=1 // pred_check_branch
      %41 = sbr.rel (0) target = $region13
    $region12: #{tpu_custom_call.1} parent=1 // pred_region
      %43 = vsyncadd [#allocation6], 0
      %s44 = sshll.u32 %s2, 4
      %s45 = int_to_ptr.hbm [resolvable:$true] %s44
      %s46 = sshll.u32 [#allocation7], 4
      %s47 = int_to_ptr.vmem [resolvable:$true] %s46
      %52 = dma.hbm_to_vmem [thread:$0]  %s45, 256, %s47, [#allocation6], 64, 64, 4
    $region13: #{tpu_custom_call.1} parent=1 // pred_fallthru
      _
    // Predicated region
    $region14: #{tpu_custom_call.1} parent=1 // pred_check
      _
    $region15: #{tpu_custom_call.1} parent=1 // pred_check_branch
      %54 = sbr.rel (0) target = $region17
    $region16: #{tpu_custom_call.1} parent=1 // pred_region
      %56 = dma.done [#allocation3], 512
    $region17: #{tpu_custom_call.1} parent=1 // pred_fallthru
      _
    // Predicated region
    $region18: #{tpu_custom_call.1} parent=1 // pred_check
      _
    $region19: #{tpu_custom_call.1} parent=1 // pred_check_branch
      %58 = sbr.rel (0) target = $region21
    $region20: #{tpu_custom_call.1} parent=1 // pred_region
      %60 = dma.done [#allocation6], 256
    $region21: #{tpu_custom_call.1} parent=1 // pred_fallthru
      _
    // Predicated region
    $region22: #{tpu_custom_call.1} parent=1 // pred_check
      _
    $region23: #{tpu_custom_call.1} parent=1 // pred_check_branch
      %62 = sbr.rel (0) target = $region25
    $region24: #{tpu_custom_call.1} parent=1 // pred_region
      %64 = dma.done [#allocation6], 256
    $region25: #{tpu_custom_call.1} parent=1 // pred_fallthru
      _
    %v66 = vld [vmem:[#allocation2] sm:$0xff]
    %v67 = vld [vmem:[#allocation2 + $0x8] sm:$0xff]
    %v68 = vld [vmem:[#allocation2 + $0x10] sm:$0xff]
    %v69 = vld [vmem:[#allocation2 + $0x18] sm:$0xff]
    %v70 = vadd.f32 %v66, 0.0
    %v71 = vadd.f32 %v67, 0.0
    %v72 = vadd.f32 %v68, 0.0
    %v73 = vadd.f32 %v69, 0.0
    %v74 = vpack.c.bf16 %v71, %v70
    %v75 = vpack.c.bf16 %v73, %v72
    %v76 = vld [vmem:[#allocation5] sm:$0xf]
    %v77 = vld [vmem:[#allocation5 + $0x4] sm:$0xf]
    %v78 = vld [vmem:[#allocation5 + $0x8] sm:$0xf]
    %v79 = vld [vmem:[#allocation5 + $0xc] sm:$0xf]
    %v84 = vunpack.c.l.b16 %v76
    %v85 = vunpack.c.l.b16 %v77
    %v86 = vunpack.c.l.b16 %v78
    %v87 = vunpack.c.l.b16 %v79
    %v88 = vpack.c.b16 %v85, %v84
    %v89 = vpack.c.b16 %v87, %v86
    %vm92 = vcmask 261120
    %v94 = vsel %vm92, %v74, 0
    %v97 = vsel %vm92, %v75, 0
    %99 = vmatpush.bf16.msra.mxu0 0
    %100 = vmatpush.bf16.msra.mxu0 0
    %101 = vmatpush.bf16.msra.mxu0 0
    %102 = vmatpush.bf16.msra.mxu0 0
    %103 = vmatpush.bf16.msra.mxu0 0
    %104 = vmatpush.bf16.msra.mxu0 0
    %105 = vmatpush.bf16.msra.mxu0 %v89
    %106 = vmatpush.bf16.msra.mxu0 %v88
    %107 = vmatmul.bf16.gmra.mxu0 %v94
    %v108 = vpop.f32.mrf.mxu0
    %v109 = vadd.f32 0.0, %v108
    %v110 = vpop.f32.mrf.mxu0
    %v111 = vadd.f32 0.0, %v110
    %112 = vmatmul.bf16.gmra.mxu0 %v97
    %v113 = vpop.f32.mrf.mxu0
    %v114 = vadd.f32 0.0, %v113
    %v115 = vpop.f32.mrf.mxu0
    %v116 = vadd.f32 0.0, %v115
    %117 = vdwg.mxu0
    %v118 = vpack.c.bf16 %v109, %v109
    %v119 = vpack.c.bf16 %v111, %v111
    %v120 = vpack.c.bf16 %v114, %v114
    %v121 = vpack.c.bf16 %v116, %v116
    %vm122 = vcmask 257024
    %123 = vst.msk [vmem:[#allocation8] sm:$0xf] %vm122, %v118
    %124 = vst.msk [vmem:[#allocation8 + $0x4] sm:$0xf] %vm122, %v119
    %125 = vst.msk [vmem:[#allocation8 + $0x8] sm:$0xf] %vm122, %v120
    %126 = vst.msk [vmem:[#allocation8 + $0xc] sm:$0xf] %vm122, %v121
    %v127 = vld [vmem:[#allocation7] sm:$0xf]
    %v128 = vld [vmem:[#allocation7 + $0x4] sm:$0xf]
    %v129 = vld [vmem:[#allocation7 + $0x8] sm:$0xf]
    %v130 = vld [vmem:[#allocation7 + $0xc] sm:$0xf]
    %v135 = vunpack.c.l.b16 %v127
    %v136 = vunpack.c.l.b16 %v128
    %v137 = vunpack.c.l.b16 %v129
    %v138 = vunpack.c.l.b16 %v130
    %v139 = vpack.c.b16 %v136, %v135
    %v140 = vpack.c.b16 %v138, %v137
    %143 = vmatpush.bf16.msra.mxu0 0
    %144 = vmatpush.bf16.msra.mxu0 0
    %145 = vmatpush.bf16.msra.mxu0 0
    %146 = vmatpush.bf16.msra.mxu0 0
    %147 = vmatpush.bf16.msra.mxu0 0
    %148 = vmatpush.bf16.msra.mxu0 0
    %149 = vmatpush.bf16.msra.mxu0 %v140
    %150 = vmatpush.bf16.msra.mxu0 %v139
    %151 = vmatmul.bf16.gmra.mxu0 %v94
    %v152 = vpop.f32.mrf.mxu0
    %v153 = vadd.f32 0.0, %v152
    %v154 = vpop.f32.mrf.mxu0
    %v155 = vadd.f32 0.0, %v154
    %156 = vmatmul.bf16.gmra.mxu0 %v97
    %v157 = vpop.f32.mrf.mxu0
    %v158 = vadd.f32 0.0, %v157
    %v159 = vpop.f32.mrf.mxu0
    %v160 = vadd.f32 0.0, %v159
    %161 = vdwg.mxu0
    %v162 = vpack.c.bf16 %v153, %v153
    %v163 = vpack.c.bf16 %v155, %v155
    %v164 = vpack.c.bf16 %v158, %v158
    %v165 = vpack.c.bf16 %v160, %v160
    %166 = vst.msk [vmem:[#allocation9] sm:$0xf] %vm122, %v162
    %167 = vst.msk [vmem:[#allocation9 + $0x4] sm:$0xf] %vm122, %v163
    %168 = vst.msk [vmem:[#allocation9 + $0x8] sm:$0xf] %vm122, %v164
    %169 = vst.msk [vmem:[#allocation9 + $0xc] sm:$0xf] %vm122, %v165
    // Predicated region
    $region26: #{tpu_custom_call.1} parent=1 // pred_check
      _
    $region27: #{tpu_custom_call.1} parent=1 // pred_check_branch
      %171 = sbr.rel (0) target = $region29
    $region28: #{tpu_custom_call.1} parent=1 // pred_region
      %173 = vsyncadd [#allocation4], 0
      %s174 = sshll.u32 [#allocation8], 4
      %s175 = int_to_ptr.vmem [resolvable:$true] %s174
      %s176 = sshll.u32 %s3, 4
      %s177 = int_to_ptr.hbm [resolvable:$true] %s176
      %182 = dma.vmem_to_hbm [thread:$0]  %s175, 256, %s177, [#allocation4], 64, 64, 4
    $region29: #{tpu_custom_call.1} parent=1 // pred_fallthru
      _
    // Predicated region
    $region30: #{tpu_custom_call.1} parent=1 // pred_check
      _
    $region31: #{tpu_custom_call.1} parent=1 // pred_check_branch
      %184 = sbr.rel (0) target = $region33
    $region32: #{tpu_custom_call.1} parent=1 // pred_region
      %186 = vsyncadd [#allocation10], 0
      %s187 = sshll.u32 [#allocation9], 4
      %s188 = int_to_ptr.vmem [resolvable:$true] %s187
      %s189 = sshll.u32 %s4, 4
      %s190 = int_to_ptr.hbm [resolvable:$true] %s189
      %195 = dma.vmem_to_hbm [thread:$0]  %s188, 256, %s190, [#allocation10], 64, 64, 4
    $region33: #{tpu_custom_call.1} parent=1 // pred_fallthru
      _
    // Predicated region
    $region34: #{tpu_custom_call.1} parent=1 // pred_check
      _
    $region35: #{tpu_custom_call.1} parent=1 // pred_check_branch
      %197 = sbr.rel (0) target = $region37
    $region36: #{tpu_custom_call.1} parent=1 // pred_region
      %199 = dma.done [#allocation4], 256
    $region37: #{tpu_custom_call.1} parent=1 // pred_fallthru
      _
    // Predicated region
    $region38: #{tpu_custom_call.1} parent=1 // pred_check
      _
    $region39: #{tpu_custom_call.1} parent=1 // pred_check_branch
      %201 = sbr.rel (0) target = $region41
    $region40: #{tpu_custom_call.1} parent=1 // pred_region
      %203 = dma.done [#allocation10], 256
    $region41: #{tpu_custom_call.1} parent=1 // pred_fallthru
      _
    %204 = vsyncpa [#allocation3], 1
    %205 = vsyncpa [#allocation6], 1
    %206 = vsyncpa [#allocation4], 1
    %207 = vsyncpa [#allocation10], 1

</llo_original>
